<compile_context>
chip_gen: v7x
topology: tpu7x:2x2x1
jax: 0.10.0
libtpu: 0.0.40
codegen_flags: <defaults>
</compile_context>

<pallas_src>
import math

import jax
import jax.numpy as jnp
import numpy as np
from jax.experimental import pallas as pl
from jax.experimental.pallas import tpu as pltpu


def _round_up(v, m):
    return (v + m - 1) // m * m


def _pow2_tile(cap):
    """Largest 128 * 2^k that is <= cap (and at least 128)."""
    cap = max(128, cap)
    t = 128
    while t * 2 <= cap:
        t *= 2
    return t


def _xw_kernel(d_ref, x_ref, w_ref, xw_ref):
    # xw = (D^{-1/2} x) @ W for one row tile (small C_in x cp matmul).
    xd = d_ref[...] * x_ref[...]
    xw_ref[...] = jnp.dot(
        xd, w_ref[...], preferred_element_type=jnp.float32
    ).astype(xw_ref.dtype)


def _gcn_agg_kernel(d_ref, xw_k_ref, xw_i_ref, adj_ref, o_ref, acc_ref):
    # Accumulate (adj @ xw) for row tile i over the k (adj-column) grid axis.
    k = pl.program_id(1)

    @pl.when(k == 0)
    def _init():
        # Fold the "+ I" contribution straight into the accumulator init.
        acc_ref[...] = xw_i_ref[...].astype(jnp.float32)

    a = adj_ref[...]
    if a.dtype != xw_k_ref.dtype:
        # Narrow adj stream (e.g. int8 / fp8) upcast in VMEM; VPU cast is hidden
        # because the kernel is HBM-bound.
        a = a.astype(xw_k_ref.dtype)
    acc_ref[...] += jnp.dot(a, xw_k_ref[...], preferred_element_type=jnp.float32)

    @pl.when(k == pl.num_programs(1) - 1)
    def _finish():
        # Left D^{-1/2} row scaling, then ELU (alpha = 1).
        z = d_ref[...] * acc_ref[...]
        elu = jnp.where(z > 0.0, z, jnp.exp(jnp.minimum(z, 0.0)) - 1.0)
        o_ref[...] = elu.astype(o_ref.dtype)


def gcn_conv(x, adj, w, *, tm=512, tk=2048, matmul_dtype=jnp.bfloat16,
             adj_dtype=None):
    """x: [N, C_in], adj: [N, N], w: [C_in, C_out] -> [N, C_out] (float32)."""
    N, C_in = x.shape
    C_out = w.shape[1]
    f32 = jnp.float32
    if adj_dtype is None:
        adj_dtype = matmul_dtype

    # Lane-dense output width (unmasked vst) and per-dimension padding sizes.
    cp = _round_up(C_out, 128)
    n128 = _round_up(N, 128)

    # Tile clamping: 128*2^k tiles (so the smaller divides the larger -> bounded
    # padding); row tile additionally capped so >= 2 row tiles exist when
    # possible (v7x has 2 TensorCores sharding the "parallel" axis).
    tm = _pow2_tile(min(tm, max(128, n128 // 2)))
    tk = _pow2_tile(min(tk, n128))

    nm = _round_up(N, tm)   # adj rows / output rows
    nk = _round_up(N, tk)   # adj cols
    nx = max(nm, nk)        # xw rows (multiple of both tm and tk)

    # deg = rowsum(adj + I) = rowsum(adj) + 1, computed once on the ORIGINAL adj
    # (no padded f32 copy).  Padded rows get a finite d = 1 (sliced off anyway).
    d = jax.lax.rsqrt(jnp.sum(adj.astype(f32), axis=1, keepdims=True) + 1.0)
    d_x = jnp.pad(d, ((0, nx - N), (0, 0)), constant_values=1.0) if nx != N else d
    d_m = jnp.pad(d, ((0, nm - N), (0, 0)), constant_values=1.0) if nm != N else d

    # Cast adj to its streaming dtype FIRST, then zero-pad (skip when aligned).
    adj_m = adj.astype(adj_dtype)
    if (nm, nk) != (N, N):
        adj_m = jnp.pad(adj_m, ((0, nm - N), (0, nk - N)))

    x_p = x.astype(f32)
    if nx != N:
        x_p = jnp.pad(x_p, ((0, nx - N), (0, 0)))
    w_p = w.astype(f32)
    if cp != C_out:
        w_p = jnp.pad(w_p, ((0, 0), (0, cp - C_out)))

    # Small per-row-tile kernel: xw = (D^{-1/2} x) @ W, emitted in matmul_dtype.
    txw = math.gcd(tm, tk)   # divides nm, nk and therefore nx
    xw = pl.pallas_call(
        _xw_kernel,
        out_shape=jax.ShapeDtypeStruct((nx, cp), matmul_dtype),
        grid=(nx // txw,),
        in_specs=[
            pl.BlockSpec((txw, 1), lambda i: (i, 0)),
            pl.BlockSpec((txw, C_in), lambda i: (i, 0)),
            pl.BlockSpec((C_in, cp), lambda i: (0, 0)),
        ],
        out_specs=pl.BlockSpec((txw, cp), lambda i: (i, 0)),
        compiler_params=pltpu.CompilerParams(dimension_semantics=("parallel",)),
    )(d_x, x_p, w_p)

    # Dominant kernel: out = ELU(d * (adj @ xw + xw)), k-tiled over adj columns.
    adj_bytes = jnp.dtype(adj_dtype).itemsize
    xw_bytes = jnp.dtype(matmul_dtype).itemsize
    vmem_need = (2 * tm * tk * adj_bytes      # double-buffered adj stream
                 + 2 * tk * cp * xw_bytes     # xw_k windows
                 + 2 * tm * cp * xw_bytes     # xw_i windows
                 + tm * cp * 4                # f32 accumulator scratch
                 + 2 * tm * cp * 4)           # f32 output windows
    vmem_limit = int(min(max(32 << 20, int(vmem_need * 1.5)), 56 << 20))

    out_p = pl.pallas_call(
        _gcn_agg_kernel,
        out_shape=jax.ShapeDtypeStruct((nm, cp), jnp.float32),
        grid_spec=pltpu.PrefetchScalarGridSpec(
            num_scalar_prefetch=0,
            grid=(nm // tm, nk // tk),
            in_specs=[
                pl.BlockSpec((tm, 1), lambda i, k: (i, 0)),   # d_inv_sqrt (row tile)
                pl.BlockSpec((tk, cp), lambda i, k: (k, 0)),  # xw rows for adj columns
                pl.BlockSpec((tm, cp), lambda i, k: (i, 0)),  # xw rows for the "+I" term
                pl.BlockSpec((tm, tk), lambda i, k: (i, k)),  # adj tile (dominant stream)
            ],
            out_specs=pl.BlockSpec((tm, cp), lambda i, k: (i, 0)),
            scratch_shapes=[pltpu.VMEM((tm, cp), jnp.float32)],
        ),
        compiler_params=pltpu.CompilerParams(
            dimension_semantics=("parallel", "arbitrary"),
            vmem_limit_bytes=vmem_limit,
        ),
    )(d_m, xw, xw, adj_m)

    return out_p[:N, :C_out]


def gcn_conv_ref(x, adj, w):
    """Pure-JAX reference mirroring the PyTorch forward exactly."""
    N = adj.shape[0]
    A = adj + jnp.eye(N, dtype=adj.dtype)
    D_hat = jnp.sqrt(jnp.linalg.inv(jnp.diag(jnp.sum(A, axis=1))))
    A_hat = D_hat @ A @ D_hat
    z = (A_hat @ x) @ w
    return jnp.where(z > 0.0, z, jnp.expm1(z))


if __name__ == "__main__":
    key = jax.random.PRNGKey(0)
    kx, ka, kw = jax.random.split(key, 3)

    # Small graph: 300 nodes (exercises rectangular padding: rows->384, cols->512),
    # 16 -> 32 features.
    N, C_in, C_out = 300, 16, 32
    x = jax.random.normal(kx, (N, C_in), dtype=jnp.float32)
    adj = (jax.random.uniform(ka, (N, N), dtype=jnp.float32) > 0.5).astype(jnp.float32)
    # Deterministic parameter init matching nn.Parameter(torch.rand(in, out)) ~ U[0, 1).
    w = jax.random.uniform(kw, (C_in, C_out), dtype=jnp.float32)

    ref = gcn_conv_ref(x, adj, w)

    # f32 MXU path: numerically tight against the reference.
    out_f32 = jax.block_until_ready(gcn_conv(x, adj, w, matmul_dtype=jnp.float32))
    np.testing.assert_allclose(np.asarray(out_f32), np.asarray(ref), rtol=1e-4, atol=1e-4)

    # Default bf16 streaming path (adj 0/1 exact in bf16; xw takes one bf16 round):
    # halves HBM traffic on the dominant adj stream, f32 accumulation/epilogue.
    out_bf16 = jax.block_until_ready(gcn_conv(x, adj, w))
    np.testing.assert_allclose(np.asarray(out_bf16), np.asarray(ref), rtol=2e-2, atol=2e-2)

    print("KERNEL_OK")
</pallas_src>

<mosaic_0001>
module attributes {stable_mosaic.version = 11 : i64} {
  func.func @_xw_kernel(%arg0: i32, %arg1: memref<128x1xf32, #tpu.memory_space<vmem>>, %arg2: memref<128x16xf32, #tpu.memory_space<vmem>>, %arg3: memref<16x128xf32, #tpu.memory_space<vmem>>, %arg4: memref<128x128xf32, #tpu.memory_space<vmem>>) attributes {dimension_semantics = [#tpu.dimension_semantics<parallel>], iteration_bounds = array<i64: 4>, scalar_prefetch = 0 : i64, scratch_operands = 0 : i64, tpu.core_type = #tpu.core_type<tc>, window_params = [{transform_indices = @transform_0, window_bounds = array<i64: 128, 1>}, {transform_indices = @transform_1, window_bounds = array<i64: 128, 16>}, {pipeline_mode = #tpu.pipeline_mode<synchronous>, transform_indices = @transform_2, window_bounds = array<i64: 16, 128>}, {transform_indices = @transform_3, window_bounds = array<i64: 128, 128>}]} {
    %c0 = arith.constant 0 : index
    %c0_0 = arith.constant 0 : index
    %0 = vector.load %arg1[%c0, %c0_0] : memref<128x1xf32, #tpu.memory_space<vmem>>, vector<128x1xf32>
    %c0_1 = arith.constant 0 : index
    %c0_2 = arith.constant 0 : index
    %1 = vector.load %arg2[%c0_1, %c0_2] : memref<128x16xf32, #tpu.memory_space<vmem>>, vector<128x16xf32>
    %2 = vector.broadcast %0 : vector<128x1xf32> to vector<128x16xf32>
    %3 = arith.mulf %2, %1 : vector<128x16xf32>
    %c0_3 = arith.constant 0 : index
    %c0_4 = arith.constant 0 : index
    %4 = vector.load %arg3[%c0_3, %c0_4] : memref<16x128xf32, #tpu.memory_space<vmem>>, vector<16x128xf32>
    %cst = arith.constant dense<0.000000e+00> : vector<128x128xf32>
    %5 = tpu.matmul %3, %4, %cst {dimension_numbers = #tpu.dot_dimension_numbers<[1], [0], [0], [1], [0, 0, 1, 1], [], []>} : vector<128x16xf32>, vector<16x128xf32>, vector<128x128xf32> -> vector<128x128xf32>
    %c0_5 = arith.constant 0 : index
    %c0_6 = arith.constant 0 : index
    %6 = vector.load %arg4[%c0_5, %c0_6] : memref<128x128xf32, #tpu.memory_space<vmem>>, vector<128x128xf32>
    tpu.vector_store %arg4[%c0_5, %c0_6], %5 {strides = array<i32>} : memref<128x128xf32, #tpu.memory_space<vmem>>, vector<128x128xf32>,
    return
  }
  func.func @transform_0(%arg0: i32) -> (i32, i32) {
    %c0_i32 = arith.constant 0 : i32
    %c0_i32_0 = arith.constant 0 : i32
    return %arg0, %c0_i32 : i32, i32
  }
  func.func @transform_1(%arg0: i32) -> (i32, i32) {
    %c0_i32 = arith.constant 0 : i32
    %c0_i32_0 = arith.constant 0 : i32
    return %arg0, %c0_i32 : i32, i32
  }
  func.func @transform_2(%arg0: i32) -> (i32, i32) {
    %c0_i32 = arith.constant 0 : i32
    %c0_i32_0 = arith.constant 0 : i32
    %c0_i32_1 = arith.constant 0 : i32
    return %c0_i32, %c0_i32_0 : i32, i32
  }
  func.func @transform_3(%arg0: i32) -> (i32, i32) {
    %c0_i32 = arith.constant 0 : i32
    %c0_i32_0 = arith.constant 0 : i32
    return %arg0, %c0_i32 : i32, i32
  }
}

</mosaic_0001>

<llo_original>
// kernel: tpu_custom_call.1
$region0: #{tpu_custom_call.1}
  #allocation0 [shape = 'u32[]', space=smem, size = 0x4, offset = 0x4, fixed_abs, tag = 'smem constant byte address 0x4 - core index']
  #allocation1 [shape = 'u32[144,128]{1,0:T(1,128)}', space=vmem, size = 0x12000, scoped, tag = 'internal scratch']
  %s0 = inlined_call_operand.vmem [shape: f32[512,1], index: 0, kind: input, shape index: {}]
  %s1 = inlined_call_operand.vmem [shape: f32[512,16], index: 1, kind: input, shape index: {}]
  %s2 = inlined_call_operand.vmem [shape: f32[16,128], index: 2, kind: input, shape index: {}]
  %s3 = inlined_call_operand.hbm [shape: f32[512,128], index: 3, kind: output, shape index: {}]
  %s4 = sld [smem:[#allocation0]]
  $region45: #{tpu_custom_call.1} parent=0
    _
  %s6 = ssub.s32 1, %s4
  %s7 = scalar_select 0, %s6, %s4
  $region1: #{tpu_custom_call.1} parent=0
    #allocation2 [shape = 'u8[131072]{0}', space=vmem, size = 0x20000, scoped, tag = 'output window, operand 0']
    #allocation3 [shape = 's32[2]{0}', space=sflag, size = 0x8, scoped, tag = 'scoped memory for tpu_custom_call.1']
    %8 = vsyncpa [#allocation3], 0
    %s9 = scalar_lea.sflag [#allocation3], 1
    %10 = vsyncpa %s9, 0
    loop: start=0, step=1, limit=6
    $region2: #{tpu_custom_call.1} parent=1 // loop_pre_header
      _
    $region3: #{tpu_custom_call.1} parent=1 // loop_header
      %s12 = sphi 0, %s16
      %p13 = scmp.ge.s32.totalorder %s12, 6
      %s22 = sphi 0, %s24
      %s25 = sphi 0, %s22
      %s26 = sphi 0, %s25
      %s42 = sphi 0, %s26
      %s48 = sphi 0, %s50
      %s51 = sphi 0, %s48
      %s52 = sphi 0, %s51
      %s68 = sphi 0, %s52
      %s72 = sphi 0, %s72
      %s74 = sphi 0, %s72
      %s75 = sphi 0, %s74
      %s89 = sphi 0, %s75
      %s95 = sphi 0, %s97
      %s98 = sphi 0, %s95
      %s99 = sphi 0, %s98
      %s115 = sphi 0, %s99
    $region4: #{tpu_custom_call.1} parent=1 // loop_header_branch
      %15 = sbr.rel (%p13) target = $region8
    $region5: #{tpu_custom_call.1} parent=1 // loop_body
      %s17 = ssub.s32 %s12, 1
      %s18 = ssub.s32 %s12, 2
      %s19 = sadd.s32 %s12, 1
      %s20 = ssub.s32 %s12, %s19
      %p21 = scmp.eq.s32.totalorder %s20, 0
      %s23 = sadd.s32 %s22, 1
      %s24 = scalar_select %p21, %s22, %s23
      %p27 = pneg %p21
      %p28 = scmp.eq.s32.totalorder %s12, 3
      %p29 = por %p27, %p28
      %p30 = scmp.ne.s32.totalorder %s22, %s25
      %p31 = scmp.eq.s32.totalorder %s12, 0
      %p32 = por %p30, %p31
      %p33 = scmp.ne.s32.totalorder %s22, %s25
      %p34 = scmp.eq.s32.totalorder %s17, 3
      %p35 = por %p33, %p34
      %p36 = scmp.ne.s32.totalorder %s25, %s26
      %p37 = scmp.eq.s32.totalorder %s17, 0
      %p38 = por %p36, %p37
      %p39 = scmp.ne.s32.totalorder %s25, %s26
      %p40 = scmp.eq.s32.totalorder %s18, 3
      %p41 = por %p39, %p40
      %p43 = scmp.ne.s32.totalorder %s26, %s42
      %p44 = scmp.eq.s32.totalorder %s18, 0
      %p45 = por %p43, %p44
      %s46 = ssub.s32 %s12, %s19
      %p47 = scmp.eq.s32.totalorder %s46, 0
      %s49 = sadd.s32 %s48, 1
      %s50 = scalar_select %p47, %s48, %s49
      %p53 = pneg %p47
      %p54 = scmp.eq.s32.totalorder %s12, 3
      %p55 = por %p53, %p54
      %p56 = scmp.ne.s32.totalorder %s48, %s51
      %p57 = scmp.eq.s32.totalorder %s12, 0
      %p58 = por %p56, %p57
      %p59 = scmp.ne.s32.totalorder %s48, %s51
      %p60 = scmp.eq.s32.totalorder %s17, 3
      %p61 = por %p59, %p60
      %p62 = scmp.ne.s32.totalorder %s51, %s52
      %p63 = scmp.eq.s32.totalorder %s17, 0
      %p64 = por %p62, %p63
      %p65 = scmp.ne.s32.totalorder %s51, %s52
      %p66 = scmp.eq.s32.totalorder %s18, 3
      %p67 = por %p65, %p66
      %p69 = scmp.ne.s32.totalorder %s52, %s68
      %p70 = scmp.eq.s32.totalorder %s18, 0
      %p71 = por %p69, %p70
      %s73 = sadd.s32 %s72, 1
      %p76 = scmp.eq.s32.totalorder %s12, 3
      %p77 = scmp.ne.s32.totalorder %s72, %s74
      %p78 = scmp.eq.s32.totalorder %s12, 0
      %p79 = por %p77, %p78
      %p80 = scmp.ne.s32.totalorder %s72, %s74
      %p81 = scmp.eq.s32.totalorder %s17, 3
      %p82 = por %p80, %p81
      %p83 = scmp.ne.s32.totalorder %s74, %s75
      %p84 = scmp.eq.s32.totalorder %s17, 0
      %p85 = por %p83, %p84
      %p86 = scmp.ne.s32.totalorder %s74, %s75
      %p87 = scmp.eq.s32.totalorder %s18, 3
      %p88 = por %p86, %p87
      %p90 = scmp.ne.s32.totalorder %s75, %s89
      %p91 = scmp.eq.s32.totalorder %s18, 0
      %p92 = por %p90, %p91
      %s93 = ssub.s32 %s12, %s19
      %p94 = scmp.eq.s32.totalorder %s93, 0
      %s96 = sadd.s32 %s95, 1
      %s97 = scalar_select %p94, %s95, %s96
      %p100 = pneg %p94
      %p101 = scmp.eq.s32.totalorder %s12, 3
      %p102 = por %p100, %p101
      %p103 = scmp.ne.s32.totalorder %s95, %s98
      %p104 = scmp.eq.s32.totalorder %s12, 0
      %p105 = por %p103, %p104
      %p106 = scmp.ne.s32.totalorder %s95, %s98
      %p107 = scmp.eq.s32.totalorder %s17, 3
      %p108 = por %p106, %p107
      %p109 = scmp.ne.s32.totalorder %s98, %s99
      %p110 = scmp.eq.s32.totalorder %s17, 0
      %p111 = por %p109, %p110
      %p112 = scmp.ne.s32.totalorder %s98, %s99
      %p113 = scmp.eq.s32.totalorder %s18, 3
      %p114 = por %p112, %p113
      %p116 = scmp.ne.s32.totalorder %s99, %s115
      %p117 = scmp.eq.s32.totalorder %s18, 0
      %p118 = por %p116, %p117
      %p119 = scmp.le.s32.totalorder 1, %s12
      %p120 = scmp.lt.s32.totalorder %s12, 5
      %p121 = pnand %p119, %p120
      %p122 = pneg %p121
      // Predicated region
      $region9: #{tpu_custom_call.1} parent=5 // pred_check
        _
      $region10: #{tpu_custom_call.1} parent=5 // pred_check_branch
        %124 = sbr.rel (%p121) target = $region12
      $region11: #{tpu_custom_call.1} parent=5 // pred_region
        %s125 = ssub.s32 %s12, 1
        // Predicated region
        $region13: #{tpu_custom_call.1} parent=11 // pred_check
          %p126 = pneg %p85
        $region14: #{tpu_custom_call.1} parent=11 // pred_check_branch
          %128 = sbr.rel (%p126) target = $region16
        $region15: #{tpu_custom_call.1} parent=11 // pred_region
          _
        $region16: #{tpu_custom_call.1} parent=11 // pred_fallthru
          _
      $region12: #{tpu_custom_call.1} parent=5 // pred_fallthru
        _
      %p129 = scmp.lt.s32.totalorder %s12, 4
      // Predicated region
      $region17: #{tpu_custom_call.1} parent=5 // pred_check
        %p130 = pneg %p129
      $region18: #{tpu_custom_call.1} parent=5 // pred_check_branch
        %132 = sbr.rel (%p130) target = $region20
      $region19: #{tpu_custom_call.1} parent=5 // pred_region
        // Predicated region
        $region21: #{tpu_custom_call.1} parent=19 // pred_check
          %p133 = pneg %p32
        $region22: #{tpu_custom_call.1} parent=19 // pred_check_branch
          %135 = sbr.rel (%p133) target = $region24
        $region23: #{tpu_custom_call.1} parent=19 // pred_region
          %s136 = smul.u32 16, %s12
          %p137 = scmp.lt.s32.totalorder %s136, 63
          %s138 = scalar_select %p137, %s136, 63
          %s139 = smul.addr %s138, 8
          %s140 = scalar_lea.vmem %s0, %s139
          %s141 = smul.u32 16, %s12
        $region24: #{tpu_custom_call.1} parent=19 // pred_fallthru
          _
        // Predicated region
        $region25: #{tpu_custom_call.1} parent=19 // pred_check
          %p142 = pneg %p58
        $region26: #{tpu_custom_call.1} parent=19 // pred_check_branch
          %144 = sbr.rel (%p142) target = $region28
        $region27: #{tpu_custom_call.1} parent=19 // pred_region
          %s145 = smul.u32 16, %s12
          %p146 = scmp.lt.s32.totalorder %s145, 63
          %s147 = scalar_select %p146, %s145, 63
          %s148 = smul.addr %s147, 8
          %s149 = scalar_lea.vmem %s1, %s148
          %s150 = smul.u32 16, %s12
        $region28: #{tpu_custom_call.1} parent=19 // pred_fallthru
          _
      $region20: #{tpu_custom_call.1} parent=5 // pred_fallthru
        _
      %p151 = scmp.le.s32.totalorder 1, %s12
      %p152 = scmp.lt.s32.totalorder %s12, 5
      %p153 = pnand %p151, %p152
      %p154 = pneg %p153
      // Predicated region
      $region29: #{tpu_custom_call.1} parent=5 // pred_check
        _
      $region30: #{tpu_custom_call.1} parent=5 // pred_check_branch
        %156 = sbr.rel (%p153) target = $region32
      $region31: #{tpu_custom_call.1} parent=5 // pred_region
        %s157 = ssub.s32 %s12, 1
        %s158 = smul.u32 16, %s17
        %p159 = scmp.lt.s32.totalorder %s158, 63
        %s160 = scalar_select %p159, %s158, 63
        %s161 = smul.addr %s160, 8
        %s162 = scalar_lea.vmem %s0, %s161
        %p163 = pneg %p38
        %p164 = pneg %p35
        %s165 = smul.u32 16, %s17
        %p166 = scmp.lt.s32.totalorder %s165, 63
        %s167 = scalar_select %p166, %s165, 63
        %s168 = smul.addr %s167, 8
        %s169 = scalar_lea.vmem %s1, %s168
        %p170 = pneg %p64
        %p171 = pneg %p61
        %p172 = pneg %p85
        %p173 = pneg %p82
        %p174 = pneg %p111
        %p175 = pneg %p108
        %s176 = sand.u32 %s98, 1
        %s177 = scalar_lea.sflag [#allocation3], %s176
        %s178 = sand.u32 %s98, 1
        %s179 = smul.addr %s178, 128
        %s180 = scalar_lea.vmem [#allocation2], %s179
        %s181 = smul.u32 16, %s17
        %p182 = scmp.lt.s32.totalorder %s181, 63
        %s183 = scalar_select %p182, %s181, 63
        %s184 = smul.addr %s183, 8
        %s185 = scalar_lea.vmem %s0, %s184
        %s186 = smul.u32 16, %s17
        %s187 = smul.u32 16, %s17
        %p188 = scmp.lt.s32.totalorder %s187, 63
        %s189 = scalar_select %p188, %s187, 63
        %s190 = smul.addr %s189, 8
        %s191 = scalar_lea.vmem %s1, %s190
        %s192 = smul.u32 16, %s17
        %s193 = smul.u32 16, %s17
        %v194 = vld [vmem:[%s185] sm:$0xff]
        %v195 = vld [vmem:[%s185 + $0x8] sm:$0xff]
        %v196 = vld [vmem:[%s185 + $0x10] sm:$0xff]
        %v197 = vld [vmem:[%s185 + $0x18] sm:$0xff]
        %v198 = vld [vmem:[%s185 + $0x20] sm:$0xff]
        %v199 = vld [vmem:[%s185 + $0x28] sm:$0xff]
        %v200 = vld [vmem:[%s185 + $0x30] sm:$0xff]
        %v201 = vld [vmem:[%s185 + $0x38] sm:$0xff]
        %v202 = vld [vmem:[%s185 + $0x40] sm:$0xff]
        %v203 = vld [vmem:[%s185 + $0x48] sm:$0xff]
        %v204 = vld [vmem:[%s185 + $0x50] sm:$0xff]
        %v205 = vld [vmem:[%s185 + $0x58] sm:$0xff]
        %v206 = vld [vmem:[%s185 + $0x60] sm:$0xff]
        %v207 = vld [vmem:[%s185 + $0x68] sm:$0xff]
        %v208 = vld [vmem:[%s185 + $0x70] sm:$0xff]
        %v209 = vld [vmem:[%s185 + $0x78] sm:$0xff]
        %v210 = vld [vmem:[%s191] sm:$0xff]
        %v211 = vld [vmem:[%s191 + $0x8] sm:$0xff]
        %v212 = vld [vmem:[%s191 + $0x10] sm:$0xff]
        %v213 = vld [vmem:[%s191 + $0x18] sm:$0xff]
        %v214 = vld [vmem:[%s191 + $0x20] sm:$0xff]
        %v215 = vld [vmem:[%s191 + $0x28] sm:$0xff]
        %v216 = vld [vmem:[%s191 + $0x30] sm:$0xff]
        %v217 = vld [vmem:[%s191 + $0x38] sm:$0xff]
        %v218 = vld [vmem:[%s191 + $0x40] sm:$0xff]
        %v219 = vld [vmem:[%s191 + $0x48] sm:$0xff]
        %v220 = vld [vmem:[%s191 + $0x50] sm:$0xff]
        %v221 = vld [vmem:[%s191 + $0x58] sm:$0xff]
        %v222 = vld [vmem:[%s191 + $0x60] sm:$0xff]
        %v223 = vld [vmem:[%s191 + $0x68] sm:$0xff]
        %v224 = vld [vmem:[%s191 + $0x70] sm:$0xff]
        %v225 = vld [vmem:[%s191 + $0x78] sm:$0xff]
        %227 = vset.pattern.permute.xlu0 0
        %228 = vperm.xlu0 %227, %v194
        %v229 = vpop.permute.xlu0 %228
        %232 = vset.pattern.permute.xlu0 0
        %233 = vperm.xlu0 %232, %v195
        %v234 = vpop.permute.xlu0 %233
        %237 = vset.pattern.permute.xlu0 0
        %238 = vperm.xlu0 %237, %v196
        %v239 = vpop.permute.xlu0 %238
        %242 = vset.pattern.permute.xlu0 0
        %243 = vperm.xlu0 %242, %v197
        %v244 = vpop.permute.xlu0 %243
        %247 = vset.pattern.permute.xlu0 0
        %248 = vperm.xlu0 %247, %v198
        %v249 = vpop.permute.xlu0 %248
        %252 = vset.pattern.permute.xlu0 0
        %253 = vperm.xlu0 %252, %v199
        %v254 = vpop.permute.xlu0 %253
        %257 = vset.pattern.permute.xlu0 0
        %258 = vperm.xlu0 %257, %v200
        %v259 = vpop.permute.xlu0 %258
        %262 = vset.pattern.permute.xlu0 0
        %263 = vperm.xlu0 %262, %v201
        %v264 = vpop.permute.xlu0 %263
        %267 = vset.pattern.permute.xlu0 0
        %268 = vperm.xlu0 %267, %v202
        %v269 = vpop.permute.xlu0 %268
        %272 = vset.pattern.permute.xlu0 0
        %273 = vperm.xlu0 %272, %v203
        %v274 = vpop.permute.xlu0 %273
        %277 = vset.pattern.permute.xlu0 0
        %278 = vperm.xlu0 %277, %v204
        %v279 = vpop.permute.xlu0 %278
        %282 = vset.pattern.permute.xlu0 0
        %283 = vperm.xlu0 %282, %v205
        %v284 = vpop.permute.xlu0 %283
        %287 = vset.pattern.permute.xlu0 0
        %288 = vperm.xlu0 %287, %v206
        %v289 = vpop.permute.xlu0 %288
        %292 = vset.pattern.permute.xlu0 0
        %293 = vperm.xlu0 %292, %v207
        %v294 = vpop.permute.xlu0 %293
        %297 = vset.pattern.permute.xlu0 0
        %298 = vperm.xlu0 %297, %v208
        %v299 = vpop.permute.xlu0 %298
        %302 = vset.pattern.permute.xlu0 0
        %303 = vperm.xlu0 %302, %v209
        %v304 = vpop.permute.xlu0 %303
        %v306 = vmul.f32 %v229, %v210
        %v307 = vmul.f32 %v234, %v211
        %v308 = vmul.f32 %v239, %v212
        %v309 = vmul.f32 %v244, %v213
        %v310 = vmul.f32 %v249, %v214
        %v311 = vmul.f32 %v254, %v215
        %v312 = vmul.f32 %v259, %v216
        %v313 = vmul.f32 %v264, %v217
        %v314 = vmul.f32 %v269, %v218
        %v315 = vmul.f32 %v274, %v219
        %v316 = vmul.f32 %v279, %v220
        %v317 = vmul.f32 %v284, %v221
        %v318 = vmul.f32 %v289, %v222
        %v319 = vmul.f32 %v294, %v223
        %v320 = vmul.f32 %v299, %v224
        %v321 = vmul.f32 %v304, %v225
        %v322 = vld [vmem:[%s2] sm:$0xff]
        %v323 = vld [vmem:[%s2 + $0x8] sm:$0xff]
        %vm324 = vcmask 130048
        %v326 = vsel %vm324, %v306, 0
        %v329 = vsel %vm324, %v307, 0
        %v332 = vsel %vm324, %v308, 0
        %v335 = vsel %vm324, %v309, 0
        %v338 = vsel %vm324, %v310, 0
        %v341 = vsel %vm324, %v311, 0
        %v344 = vsel %vm324, %v312, 0
        %v347 = vsel %vm324, %v313, 0
        %v350 = vsel %vm324, %v314, 0
        %v353 = vsel %vm324, %v315, 0
        %v356 = vsel %vm324, %v316, 0
        %v359 = vsel %vm324, %v317, 0
        %v362 = vsel %vm324, %v318, 0
        %v365 = vsel %vm324, %v319, 0
        %v368 = vsel %vm324, %v320, 0
        %v371 = vsel %vm324, %v321, 0
        %373 = vmatprep.subr.mxu0 0.0
        %374 = vmatpush1.msra.mxu0 %v322
        %375 = vmatprep.subr.mxu0 0.0
        %376 = vmatpush1.msra.mxu0 %v323
        %377 = vmatprep.subr.mxu0 0.0
        %378 = vmatpush1.msra.mxu0 0.0
        %379 = vmatprep.subr.mxu0 0.0
        %380 = vmatpush1.msra.mxu0 0.0
        %381 = vmatprep.subr.mxu0 0.0
        %382 = vmatpush1.msra.mxu0 0.0
        %383 = vmatprep.subr.mxu0 0.0
        %384 = vmatpush1.msra.mxu0 0.0
        %385 = vmatprep.subr.mxu0 0.0
        %386 = vmatpush1.msra.mxu0 0.0
        %387 = vmatprep.subr.mxu0 0.0
        %388 = vmatpush1.msra.mxu0 0.0
        %389 = vmatprep.subr.mxu0 0.0
        %390 = vmatpush1.msra.mxu0 0.0
        %391 = vmatprep.subr.mxu0 0.0
        %392 = vmatpush1.msra.mxu0 0.0
        %393 = vmatprep.subr.mxu0 0.0
        %394 = vmatpush1.msra.mxu0 0.0
        %395 = vmatprep.subr.mxu0 0.0
        %396 = vmatpush1.msra.mxu0 0.0
        %397 = vmatprep.subr.mxu0 0.0
        %398 = vmatpush1.msra.mxu0 0.0
        %399 = vmatprep.subr.mxu0 0.0
        %400 = vmatpush1.msra.mxu0 0.0
        %401 = vmatprep.subr.mxu0 0.0
        %402 = vmatpush1.msra.mxu0 0.0
        %403 = vmatprep.subr.mxu0 0.0
        %404 = vmatpush1.msra.mxu0 0.0
        %405 = vmatprep.subr.mxu0 0.0
        %406 = vmatpush1.msra.mxu0 0.0
        %407 = vmatprep.subr.mxu0 0.0
        %408 = vmatpush1.msra.mxu0 0.0
        %409 = vmatprep.subr.mxu0 0.0
        %410 = vmatpush1.msra.mxu0 0.0
        %411 = vmatprep.subr.mxu0 0.0
        %412 = vmatpush1.msra.mxu0 0.0
        %413 = vmatprep.subr.mxu0 0.0
        %414 = vmatpush1.msra.mxu0 0.0
        %415 = vmatprep.subr.mxu0 0.0
        %416 = vmatpush1.msra.mxu0 0.0
        %417 = vmatprep.subr.mxu0 0.0
        %418 = vmatpush1.msra.mxu0 0.0
        %419 = vmatprep.subr.mxu0 0.0
        %420 = vmatpush1.msra.mxu0 0.0
        %421 = vmatprep.subr.mxu0 0.0
        %422 = vmatpush1.msra.mxu0 0.0
        %423 = vmatprep.subr.mxu0 0.0
        %424 = vmatpush1.msra.mxu0 0.0
        %425 = vmatprep.subr.mxu0 0.0
        %426 = vmatpush1.msra.mxu0 0.0
        %427 = vmatprep.subr.mxu0 0.0
        %428 = vmatpush1.msra.mxu0 0.0
        %429 = vmatprep.subr.mxu0 0.0
        %430 = vmatpush1.msra.mxu0 0.0
        %431 = vmatprep.subr.mxu0 0.0
        %432 = vmatpush1.msra.mxu0 0.0
        %433 = vmatprep.subr.mxu0 0.0
        %434 = vmatpush1.msra.mxu0 0.0
        %435 = vmatprep.subr.mxu0 0.0
        %436 = vmatpush1.msra.mxu0 0.0
        %437 = vmatprep.mubr.f32.mxu0 0.0
        %438 = vmatmul.mubr.f32.gmra.mrb[0].mxu0 %v326
        %v439 = vpop.f32.mrb[0].mxu0
        %v440 = vadd.f32 0.0, %v439
        %v441 = vpop.f32.mrb[0].mxu0
        %442 = vmatprep.mubr.f32.mxu0 0.0
        %443 = vmatmul.mubr.f32.gmra.mrb[0].mxu0 %v329
        %v444 = vpop.f32.mrb[0].mxu0
        %v445 = vadd.f32 0.0, %v444
        %v446 = vpop.f32.mrb[0].mxu0
        %447 = vmatprep.mubr.f32.mxu0 0.0
        %448 = vmatmul.mubr.f32.gmra.mrb[0].mxu0 %v332
        %v449 = vpop.f32.mrb[0].mxu0
        %v450 = vadd.f32 0.0, %v449
        %v451 = vpop.f32.mrb[0].mxu0
        %452 = vmatprep.mubr.f32.mxu0 0.0
        %453 = vmatmul.mubr.f32.gmra.mrb[0].mxu0 %v335
        %v454 = vpop.f32.mrb[0].mxu0
        %v455 = vadd.f32 0.0, %v454
        %v456 = vpop.f32.mrb[0].mxu0
        %457 = vmatprep.mubr.f32.mxu0 0.0
        %458 = vmatmul.mubr.f32.gmra.mrb[0].mxu0 %v338
        %v459 = vpop.f32.mrb[0].mxu0
        %v460 = vadd.f32 0.0, %v459
        %v461 = vpop.f32.mrb[0].mxu0
        %462 = vmatprep.mubr.f32.mxu0 0.0
        %463 = vmatmul.mubr.f32.gmra.mrb[0].mxu0 %v341
        %v464 = vpop.f32.mrb[0].mxu0
        %v465 = vadd.f32 0.0, %v464
        %v466 = vpop.f32.mrb[0].mxu0
        %467 = vmatprep.mubr.f32.mxu0 0.0
        %468 = vmatmul.mubr.f32.gmra.mrb[0].mxu0 %v344
        %v469 = vpop.f32.mrb[0].mxu0
        %v470 = vadd.f32 0.0, %v469
        %v471 = vpop.f32.mrb[0].mxu0
        %472 = vmatprep.mubr.f32.mxu0 0.0
        %473 = vmatmul.mubr.f32.gmra.mrb[0].mxu0 %v347
        %v474 = vpop.f32.mrb[0].mxu0
        %v475 = vadd.f32 0.0, %v474
        %v476 = vpop.f32.mrb[0].mxu0
        %477 = vmatprep.mubr.f32.mxu0 0.0
        %478 = vmatmul.mubr.f32.gmra.mrb[0].mxu0 %v350
        %v479 = vpop.f32.mrb[0].mxu0
        %v480 = vadd.f32 0.0, %v479
        %v481 = vpop.f32.mrb[0].mxu0
        %482 = vmatprep.mubr.f32.mxu0 0.0
        %483 = vmatmul.mubr.f32.gmra.mrb[0].mxu0 %v353
        %v484 = vpop.f32.mrb[0].mxu0
        %v485 = vadd.f32 0.0, %v484
        %v486 = vpop.f32.mrb[0].mxu0
        %487 = vmatprep.mubr.f32.mxu0 0.0
        %488 = vmatmul.mubr.f32.gmra.mrb[0].mxu0 %v356
        %v489 = vpop.f32.mrb[0].mxu0
        %v490 = vadd.f32 0.0, %v489
        %v491 = vpop.f32.mrb[0].mxu0
        %492 = vmatprep.mubr.f32.mxu0 0.0
        %493 = vmatmul.mubr.f32.gmra.mrb[0].mxu0 %v359
        %v494 = vpop.f32.mrb[0].mxu0
        %v495 = vadd.f32 0.0, %v494
        %v496 = vpop.f32.mrb[0].mxu0
        %497 = vmatprep.mubr.f32.mxu0 0.0
        %498 = vmatmul.mubr.f32.gmra.mrb[0].mxu0 %v362
        %v499 = vpop.f32.mrb[0].mxu0
        %v500 = vadd.f32 0.0, %v499
        %v501 = vpop.f32.mrb[0].mxu0
        %502 = vmatprep.mubr.f32.mxu0 0.0
        %503 = vmatmul.mubr.f32.gmra.mrb[0].mxu0 %v365
        %v504 = vpop.f32.mrb[0].mxu0
        %v505 = vadd.f32 0.0, %v504
        %v506 = vpop.f32.mrb[0].mxu0
        %507 = vmatprep.mubr.f32.mxu0 0.0
        %508 = vmatmul.mubr.f32.gmra.mrb[0].mxu0 %v368
        %v509 = vpop.f32.mrb[0].mxu0
        %v510 = vadd.f32 0.0, %v509
        %v511 = vpop.f32.mrb[0].mxu0
        %512 = vmatprep.mubr.f32.mxu0 0.0
        %513 = vmatmul.mubr.f32.gmra.mrb[0].mxu0 %v371
        %v514 = vpop.f32.mrb[0].mxu0
        %v515 = vadd.f32 0.0, %v514
        %v516 = vpop.f32.mrb[0].mxu0
        %517 = vdwg.mxu0
        %518 = vst [vmem:[%s180] sm:$0xff] %v440
        %519 = vst [vmem:[%s180 + $0x8] sm:$0xff] %v445
        %520 = vst [vmem:[%s180 + $0x10] sm:$0xff] %v450
        %521 = vst [vmem:[%s180 + $0x18] sm:$0xff] %v455
        %522 = vst [vmem:[%s180 + $0x20] sm:$0xff] %v460
        %523 = vst [vmem:[%s180 + $0x28] sm:$0xff] %v465
        %524 = vst [vmem:[%s180 + $0x30] sm:$0xff] %v470
        %525 = vst [vmem:[%s180 + $0x38] sm:$0xff] %v475
        %526 = vst [vmem:[%s180 + $0x40] sm:$0xff] %v480
        %527 = vst [vmem:[%s180 + $0x48] sm:$0xff] %v485
        %528 = vst [vmem:[%s180 + $0x50] sm:$0xff] %v490
        %529 = vst [vmem:[%s180 + $0x58] sm:$0xff] %v495
        %530 = vst [vmem:[%s180 + $0x60] sm:$0xff] %v500
        %531 = vst [vmem:[%s180 + $0x68] sm:$0xff] %v505
        %532 = vst [vmem:[%s180 + $0x70] sm:$0xff] %v510
        %533 = vst [vmem:[%s180 + $0x78] sm:$0xff] %v515
        %s534 = sand.u32 %s98, 1
        %s535 = scalar_lea.sflag [#allocation3], %s534
        %s536 = sand.u32 %s98, 1
        %s537 = smul.addr %s536, 128
        %s538 = scalar_lea.vmem [#allocation2], %s537
        // Predicated region
        $region33: #{tpu_custom_call.1} parent=31 // pred_check
          %p539 = pneg %p108
        $region34: #{tpu_custom_call.1} parent=31 // pred_check_branch
          %541 = sbr.rel (%p539) target = $region36
        $region35: #{tpu_custom_call.1} parent=31 // pred_region
          %s542 = smul.u32 16, %s17
          %s544 = ssub.s32 2048, 2048
          %545 = vsyncadd %s535, %s544
          %s546 = smul.addr %s542, 128
          %s547 = scalar_lea.hbm %s3, %s546
          %s548 = sshll.u32 %s538, 4
          %s549 = int_to_ptr.vmem [resolvable:$true] %s548
          %554 = dma.vmem_to_hbm [thread:$0]  %s549, 2048, %s547, %s535, 128, 128, 8
        $region36: #{tpu_custom_call.1} parent=31 // pred_fallthru
          _
      $region32: #{tpu_custom_call.1} parent=5 // pred_fallthru
        _
      %p555 = scmp.le.s32.totalorder 2, %s12
      // Predicated region
      $region37: #{tpu_custom_call.1} parent=5 // pred_check
        %p556 = pneg %p555
      $region38: #{tpu_custom_call.1} parent=5 // pred_check_branch
        %558 = sbr.rel (%p556) target = $region40
      $region39: #{tpu_custom_call.1} parent=5 // pred_region
        %s559 = ssub.s32 %s12, 2
        // Predicated region
        $region41: #{tpu_custom_call.1} parent=39 // pred_check
          %p560 = pneg %p114
        $region42: #{tpu_custom_call.1} parent=39 // pred_check_branch
          %562 = sbr.rel (%p560) target = $region44
        $region43: #{tpu_custom_call.1} parent=39 // pred_region
          %s563 = sand.u32 %s99, 1
          %s564 = scalar_lea.sflag [#allocation3], %s563
          %s565 = sand.u32 %s99, 1
          %s566 = smul.addr %s565, 128
          %s567 = scalar_lea.vmem [#allocation2], %s566
          %568 = dma.done %s564, 2048
        $region44: #{tpu_custom_call.1} parent=39 // pred_fallthru
          _
      $region40: #{tpu_custom_call.1} parent=5 // pred_fallthru
        _
    $region6: #{tpu_custom_call.1} parent=1 // loop_footer
      %s16 = sadd.s32 1, %s12
    $region7: #{tpu_custom_call.1} parent=1 // loop_footer_branch
      %11 = sbr.rel target = $region3
    $region8: #{tpu_custom_call.1} parent=1 // loop_exit
      _
    %569 = vsyncpa [#allocation3], 1
    %s570 = scalar_lea.sflag [#allocation3], 1
    %571 = vsyncpa %s570, 1

</llo_original>
